<compile_context>
chip_gen: v7x
topology: tpu7x:2x2x1
jax: 0.10.0
libtpu: 0.0.40
codegen_flags: <defaults>
</compile_context>

<pallas_src>
import functools
import math

import jax
import jax.numpy as jnp
from jax.experimental import pallas as pl
from jax.experimental.pallas import tpu as pltpu


LANES = 128
SUBLANES = 8
GROUP = SUBLANES * LANES              # 1024 elements = one (8,128) f32 vreg

TILE_TARGET_ELEMS = 1 << 20           # ~4 MiB f32 blocks (amortizes grid-step overhead)
MAX_SLAB_BYTES = 8 << 20              # largest (H, W) slab the native tiled path accepts
TILED_VMEM_LIMIT = 48 << 20           # explicit: safe on v7x (64 MiB phys), overrides v5e 16 MiB default


def _cdiv(a, b):
    return -(-a // b)


def _round_up(a, b):
    return _cdiv(a, b) * b


@functools.lru_cache(maxsize=1)
def _vmem_capacity_bytes():
    try:
        return int(pltpu.get_tpu_info().vmem_capacity_bytes)
    except Exception:
        return 64 << 20               # conservative default (v7x per-TensorCore VMEM)


def _padded_footprint_elems(shape):
    """Elements the TPU physically stores: (8,128)-tiling of the last two dims."""
    if len(shape) < 2:
        n = shape[0] if len(shape) == 1 else 1
        return _round_up(max(n, 1), GROUP)
    lead = math.prod(shape[:-2]) if len(shape) > 2 else 1
    return lead * _round_up(shape[-2], SUBLANES) * _round_up(shape[-1], LANES)


# ----------------------------- kernels ---------------------------------------


def _fused_kernel(x_ref, o_ref, *, n_valid):
    """Whole tensor resident in VMEM: fill NaNs, exact global (x - mean) / std."""
    x = x_ref[...]
    y = jnp.where(jnp.isnan(x), 0.0, x).astype(jnp.float32)
    inv_n = jnp.float32(1.0 / n_valid)
    mean = jnp.sum(y) * inv_n
    centered = y - mean
    var = jnp.sum(centered * centered) * inv_n     # population variance (exact, no padding)
    inv_std = jax.lax.rsqrt(var)                   # std == 0 -> inf (matches torch x/0)
    o_ref[...] = (centered * inv_std).astype(o_ref.dtype)


def _reduce_kernel(shift_ref, x_ref, part_ref, *, m_total, bm, tiles_per_chunk):
    """Pass 1: per-(S, L) partial sum / shifted sum-of-squares for one chunk."""
    c = pl.program_id(0)
    t = pl.program_id(1)

    @pl.when(t == 0)
    def _init():
        part_ref[...] = jnp.zeros_like(part_ref)

    start = (c * tiles_per_chunk + t) * bm         # un-clamped leading-row offset
    valid = m_total - start                        # rows of this block holding real data

    shift = shift_ref[0]                           # pilot shift (~mean) from SMEM
    x = x_ref[...]                                 # (bm, S, L) block
    y = jnp.where(jnp.isnan(x), 0.0, x).astype(jnp.float32)
    z = y - shift

    @pl.when(valid >= bm)                          # full tile: no masking cost
    def _full():
        part_ref[0, 0] += jnp.sum(y, axis=0)
        part_ref[0, 1] += jnp.sum(z * z, axis=0)

    @pl.when(jnp.logical_and(valid > 0, valid < bm))   # ragged edge tile only
    def _ragged():
        rows = jax.lax.broadcasted_iota(jnp.int32, x.shape, 0)
        keep = rows < valid
        part_ref[0, 0] += jnp.sum(jnp.where(keep, y, 0.0), axis=0)
        part_ref[0, 1] += jnp.sum(jnp.where(keep, z * z, 0.0), axis=0)
    # valid <= 0 (clamped duplicate grid slot when the tile count is odd): skip.


def _normalize_kernel(stats_ref, x_ref, o_ref):
    """Pass 2: out = fill_nans(x) * (1/std) - mean/std (elementwise, FMA friendly)."""
    scale = stats_ref[0]
    offset = stats_ref[1]
    x = x_ref[...]
    y = jnp.where(jnp.isnan(x), 0.0, x).astype(jnp.float32)
    o_ref[...] = (y * scale - offset).astype(o_ref.dtype)


# ----------------------------- wrappers ---------------------------------------


def _fused_path(x, total, vmem_cap):
    """Single-block path: 1 HBM read + 1 HBM write, no wrapper copies."""
    # TODO(synk): at the top of its size range this path has no DMA/compute
    # overlap; an inner pltpu.emit_pipeline over the read would recover that.
    orig_shape = x.shape
    if x.ndim >= 3:
        s, l = x.shape[-2], x.shape[-1]
        xv = x.reshape(total // (s * l), s, l)     # merge leading dims: layout preserving
    elif x.ndim == 2:
        xv = x
    else:
        xv = x.reshape(1, -1)
    itemsize = jnp.dtype(x.dtype).itemsize
    out = pl.pallas_call(
        functools.partial(_fused_kernel, n_valid=total),
        out_shape=jax.ShapeDtypeStruct(xv.shape, x.dtype),
        compiler_params=pltpu.CompilerParams(
            vmem_limit_bytes=int(vmem_cap * 3 // 4)),
        cost_estimate=pl.CostEstimate(
            flops=6 * total, transcendentals=1,
            bytes_accessed=2 * total * itemsize),
    )(xv)
    return out.reshape(orig_shape)


def _two_pass(x3, n_valid, n_pad, out_dtype, tile_elems):
    """Tiled reduce + normalize over a 3-D (M, S, L) view.

    Every leading row is real data except that the final `n_pad` elements (flat
    fallback only) are known zero padding, corrected analytically below.
    """
    m_total, s, l = x3.shape
    slab_padded = _round_up(s, SUBLANES) * _round_up(l, LANES)
    bm = max(1, min(m_total, tile_elems // slab_padded))
    num_tiles = _cdiv(m_total, bm)
    nchunk = 2 if num_tiles >= 2 else 1    # feeds both v7x TensorCores; ~free on 1-TC chips
    tpc = _cdiv(num_tiles, nchunk)         # tiles per chunk
    itemsize = jnp.dtype(x3.dtype).itemsize

    # Pilot shift (cheap mean estimate) -> cancellation-free shifted sum of squares.
    first = x3[0, 0, 0]
    pilot = jnp.where(jnp.isnan(first), 0.0, first).astype(jnp.float32).reshape(1)

    if nchunk * tpc == num_tiles:
        x_index = lambda c, t: (c * tpc + t, 0, 0)
    else:
        # Clamp so the single grid slot past the last tile re-reads a valid
        # block; its contribution is skipped in-kernel (valid <= 0).
        x_index = lambda c, t: (jnp.minimum(c * tpc + t, num_tiles - 1), 0, 0)

    partials = pl.pallas_call(
        functools.partial(_reduce_kernel, m_total=m_total, bm=bm, tiles_per_chunk=tpc),
        out_shape=jax.ShapeDtypeStruct((nchunk, 2, s, l), jnp.float32),
        grid=(nchunk, tpc),
        in_specs=[
            pl.BlockSpec(memory_space=pltpu.MemorySpace.SMEM),
            pl.BlockSpec((bm, s, l), x_index),
        ],
        out_specs=pl.BlockSpec((1, 2, s, l), lambda c, t: (c, 0, 0, 0)),
        compiler_params=pltpu.CompilerParams(
            dimension_semantics=("parallel", "arbitrary"),
            vmem_limit_bytes=TILED_VMEM_LIMIT),
        cost_estimate=pl.CostEstimate(
            flops=6 * x3.size, transcendentals=0,
            bytes_accessed=x3.size * itemsize),
    )(pilot, x3)

    # Tiny cross-lane finalization in plain JAX (f32 scalars).
    n = jnp.float32(n_valid)
    shift = pilot[0]
    total_sum = jnp.sum(partials[:, 0])
    total_zsq = jnp.sum(partials[:, 1]) - jnp.float32(n_pad) * shift * shift
    mean = total_sum / n
    d = mean - shift
    var = jnp.maximum(total_zsq / n - d * d, 0.0)   # population variance
    inv_std = jax.lax.rsqrt(var)                    # std == 0 -> inf (matches torch x/0)
    stats = jnp.stack([inv_std, mean * inv_std]).astype(jnp.float32)  # (scale, offset)

    out3 = pl.pallas_call(
        _normalize_kernel,
        out_shape=jax.ShapeDtypeStruct(x3.shape, out_dtype),
        grid=(num_tiles,),
        in_specs=[
            pl.BlockSpec(memory_space=pltpu.MemorySpace.SMEM),
            pl.BlockSpec((bm, s, l), lambda i: (i, 0, 0)),
        ],
        out_specs=pl.BlockSpec((bm, s, l), lambda i: (i, 0, 0)),
        compiler_params=pltpu.CompilerParams(
            dimension_semantics=("parallel",),
            vmem_limit_bytes=TILED_VMEM_LIMIT),
        cost_estimate=pl.CostEstimate(
            flops=4 * x3.size, transcendentals=0,
            bytes_accessed=x3.size * (itemsize + jnp.dtype(out_dtype).itemsize)),
    )(stats, x3)
    return out3


def _tiled_native(x, total, tile_elems):
    """Zero-copy tiled path: view x as (prod(leading dims), H, W), tile along dim 0."""
    s, l = x.shape[-2], x.shape[-1]
    x3 = x.reshape(total // (s * l), s, l)          # layout-preserving view
    out3 = _two_pass(x3, total, 0, x.dtype, tile_elems)
    return out3.reshape(x.shape)


def _tiled_flat(x, total, tile_elems):
    """Fallback for shapes the native view cannot tile (ndim < 3 / huge slabs)."""
    # TODO(synk): this fallback still pays one pad copy and one slice copy; the
    # native path above avoids both for ndim >= 3 inputs.
    flat = x.reshape(-1)
    groups = _cdiv(total, GROUP)
    padded = groups * GROUP
    if padded != total:
        flat = jnp.pad(flat, (0, padded - total))
    x3 = flat.reshape(groups, SUBLANES, LANES)
    out3 = _two_pass(x3, total, padded - total, x.dtype, tile_elems)
    out = out3.reshape(-1)
    if padded != total:
        out = out[:total]
    return out.reshape(x.shape)


@functools.partial(jax.jit, static_argnames=("force_tiled", "tile_elems"))
def preprocessing(x, force_tiled=False, tile_elems=None):
    """Pallas equivalent of Preprocessing().forward(x)."""
    total = x.size
    if total == 0:
        return x
    vmem_cap = _vmem_capacity_bytes()
    # Generation-aware fused threshold: block + f32 temps must fit in VMEM
    # (v7x: 64 MiB -> ~12.8 MiB tensors; v5e/v6e: 128 MiB -> ~25.6 MiB tensors).
    fused_max_bytes = vmem_cap // 5
    if (not force_tiled) and _padded_footprint_elems(x.shape) * 4 <= fused_max_bytes:
        return _fused_path(x, total, vmem_cap)

    te = TILE_TARGET_ELEMS if tile_elems is None else int(tile_elems)
    if x.ndim >= 3:
        slab_bytes = _round_up(x.shape[-2], SUBLANES) * _round_up(x.shape[-1], LANES) * 4
        if slab_bytes <= MAX_SLAB_BYTES:
            return _tiled_native(x, total, te)
    return _tiled_flat(x, total, te)


# ----------------------------- test harness -----------------------------------


def _reference(x):
    """Pure-JAX reference mirroring the PyTorch module exactly."""
    y = jnp.where(jnp.isnan(x), 0.0, x)
    mean = jnp.mean(y)
    std = jnp.sqrt(jnp.mean((y - mean) ** 2))       # unbiased=False (population)
    return (y - mean) / std


def _check(x, tol, **kwargs):
    out = preprocessing(x, **kwargs)
    jax.block_until_ready(out)
    ref = _reference(x)
    assert out.shape == x.shape and out.dtype == x.dtype
    err = float(jnp.max(jnp.abs(out - ref)))
    assert err <= tol, f"max abs err {err} > {tol}"
    return out


def _with_nans(x, idx):
    shape = x.shape
    return x.reshape(-1).at[jnp.array(idx)].set(jnp.nan).reshape(shape)


if __name__ == "__main__":
    key = jax.random.PRNGKey(0)
    k1, k2, k3, k4, k5 = jax.random.split(key, 5)

    # 1) Small NCHW input -> fused single-block path (original-shape block).
    x1 = _with_nans(jax.random.normal(k1, (2, 4, 16, 16), dtype=jnp.float32),
                    [3, 77, 512, 1023, 2000])
    _check(x1, 2e-5)

    # 2) Fused path with a ragged last dim: no padding or masking needed at all.
    x2 = _with_nans(jax.random.normal(k2, (2, 4, 16, 15), dtype=jnp.float32) * 3.0 + 1.5,
                    [0, 100, 1000])
    _check(x2, 2e-5)

    # 3) Native tiled path with forced small tiles: exercises full tiles, the
    #    ragged edge tile, the clamped duplicate grid slot, and 2-chunk pass 1.
    x3 = _with_nans(jax.random.normal(k3, (2, 5, 64, 48), dtype=jnp.float32) * 2.0 - 0.5,
                    [5, 1234, 20000, 30000])
    _check(x3, 2e-4, force_tiled=True, tile_elems=35000)

    # 4) Native tiled path, default tile size, large mean offset (exercises the
    #    pilot-shifted variance that avoids E[x^2]-mean^2 cancellation).
    x4 = _with_nans(jax.random.normal(k4, (2, 3, 270, 270), dtype=jnp.float32) + 10.0,
                    [7, 40000, 400000])
    _check(x4, 5e-4, force_tiled=True)

    # 5) Flat fallback (ndim < 3): pad-to-1024 + analytic pad correction.
    x5 = _with_nans(jax.random.normal(k5, (700, 61), dtype=jnp.float32) * 0.25 + 4.0,
                    [11, 4096, 42000])
    _check(x5, 2e-4, force_tiled=True, tile_elems=8192)

    print("KERNEL_OK")
</pallas_src>

<mosaic_0001>
module attributes {stable_mosaic.version = 11 : i64} {
  func.func @_fused_kernel(%arg0: memref<8x16x16xf32, #tpu.memory_space<vmem>>, %arg1: memref<8x16x16xf32, #tpu.memory_space<vmem>>) attributes {dimension_semantics = [], scalar_prefetch = 0 : i64, scratch_operands = 0 : i64, tpu.core_type = #tpu.core_type<tc>} {
    %c0 = arith.constant 0 : index
    %c0_0 = arith.constant 0 : index
    %c0_1 = arith.constant 0 : index
    %0 = vector.load %arg0[%c0, %c0_0, %c0_1] : memref<8x16x16xf32, #tpu.memory_space<vmem>>, vector<8x16x16xf32>
    %1 = arith.cmpf one, %0, %0 : vector<8x16x16xf32>
    %cst = arith.constant 0.000000e+00 : f32
    %2 = vector.broadcast %cst : f32 to vector<8x16x16xf32>
    %3 = arith.select %1, %2, %0 : vector<8x16x16xi1>, vector<8x16x16xf32>
    %4 = vector.shape_cast %3 : vector<8x16x16xf32> to vector<1x8x16x16xf32>
    %cst_2 = arith.constant dense<0.000000e+00> : vector<1xf32>
    %5 = vector.multi_reduction <add>, %4, %cst_2 [1, 2, 3] : vector<1x8x16x16xf32> to vector<1xf32>
    %6 = vector.shape_cast %5 : vector<1xf32> to vector<1x1x1x1xf32>
    %7 = vector.extract %6[0, 0, 0, 0] : f32 from vector<1x1x1x1xf32>
    %cst_3 = arith.constant 4.8828125E-4 : f32
    %8 = arith.mulf %7, %cst_3 : f32
    %9 = vector.broadcast %8 : f32 to vector<8x16x16xf32>
    %10 = arith.subf %3, %9 : vector<8x16x16xf32>
    %11 = arith.mulf %10, %10 : vector<8x16x16xf32>
    %12 = vector.shape_cast %11 : vector<8x16x16xf32> to vector<1x8x16x16xf32>
    %cst_4 = arith.constant dense<0.000000e+00> : vector<1xf32>
    %13 = vector.multi_reduction <add>, %12, %cst_4 [1, 2, 3] : vector<1x8x16x16xf32> to vector<1xf32>
    %14 = vector.shape_cast %13 : vector<1xf32> to vector<1x1x1x1xf32>
    %15 = vector.extract %14[0, 0, 0, 0] : f32 from vector<1x1x1x1xf32>
    %cst_5 = arith.constant 4.8828125E-4 : f32
    %16 = arith.mulf %15, %cst_5 : f32
    %17 = math.rsqrt %16 : f32
    %18 = vector.broadcast %17 : f32 to vector<8x16x16xf32>
    %19 = arith.mulf %10, %18 : vector<8x16x16xf32>
    %c0_6 = arith.constant 0 : index
    %c0_7 = arith.constant 0 : index
    %c0_8 = arith.constant 0 : index
    %20 = vector.load %arg1[%c0_6, %c0_7, %c0_8] : memref<8x16x16xf32, #tpu.memory_space<vmem>>, vector<8x16x16xf32>
    tpu.vector_store %arg1[%c0_6, %c0_7, %c0_8], %19 {strides = array<i32>} : memref<8x16x16xf32, #tpu.memory_space<vmem>>, vector<8x16x16xf32>,
    return
  }
}

</mosaic_0001>

<llo_original>
// kernel: preprocessing.1
$region0: #{preprocessing.1}
  #allocation0 [shape = 'u32[]', space=smem, size = 0x4, offset = 0x4, fixed_abs, tag = 'smem constant byte address 0x4 - core index']
  #allocation1 [shape = 'u32[144,128]{1,0:T(1,128)}', space=vmem, size = 0x12000, scoped, tag = 'internal scratch']
  %s0 = inlined_call_operand.hbm [shape: f32[8,16,16], index: 0, kind: input, shape index: {}]
  %s1 = inlined_call_operand.hbm [shape: f32[8,16,16], index: 1, kind: output, shape index: {}]
  %s2 = sld [smem:[#allocation0]]
  $region18: #{preprocessing.1} parent=0
    _
  %s4 = ssub.s32 1, %s2
  %s5 = scalar_select 0, %s4, %s2
  $region1: #{preprocessing.1} parent=0
    #allocation2 [shape = 'u8[65536]{0}', space=vmem, size = 0x10000, scoped, tag = 'input window, operand 0, single buffered']
    #allocation3 [shape = 's32[1]{0}', space=sflag, size = 0x4, scoped, tag = 'scoped memory for preprocessing.1']
    #allocation4 [shape = 's32[1]{0}', space=sflag, size = 0x4, scoped, tag = 'scoped memory for preprocessing.1']
    #allocation5 [shape = 'u8[65536]{0}', space=vmem, size = 0x10000, scoped, tag = 'output window, operand 0, single buffered']
    %6 = vsyncpa [#allocation3], 0
    %7 = vsyncpa [#allocation4], 0
    // Predicated region
    $region2: #{preprocessing.1} parent=1 // pred_check
      _
    $region3: #{preprocessing.1} parent=1 // pred_check_branch
      %9 = sbr.rel (0) target = $region5
    $region4: #{preprocessing.1} parent=1 // pred_region
      %s11 = ssub.s32 2048, 2048
      %12 = vsyncadd [#allocation3], %s11
      %s13 = sshll.u32 [#allocation2], 4
      %s14 = int_to_ptr.vmem [resolvable:$true] %s13
      %19 = dma.hbm_to_vmem [thread:$0]  %s0, 2048, %s14, [#allocation3], 128, 128, 8
    $region5: #{preprocessing.1} parent=1 // pred_fallthru
      _
    // Predicated region
    $region6: #{preprocessing.1} parent=1 // pred_check
      _
    $region7: #{preprocessing.1} parent=1 // pred_check_branch
      %21 = sbr.rel (0) target = $region9
    $region8: #{preprocessing.1} parent=1 // pred_region
      %22 = dma.done [#allocation3], 2048
    $region9: #{preprocessing.1} parent=1 // pred_fallthru
      _
    %v23 = vld [vmem:[#allocation2] sm:$0xff]
    %v24 = vld [vmem:[#allocation2 + $0x8] sm:$0xff]
    %v25 = vld [vmem:[#allocation2 + $0x10] sm:$0xff]
    %v26 = vld [vmem:[#allocation2 + $0x18] sm:$0xff]
    %v27 = vld [vmem:[#allocation2 + $0x20] sm:$0xff]
    %v28 = vld [vmem:[#allocation2 + $0x28] sm:$0xff]
    %v29 = vld [vmem:[#allocation2 + $0x30] sm:$0xff]
    %v30 = vld [vmem:[#allocation2 + $0x38] sm:$0xff]
    %v31 = vld [vmem:[#allocation2 + $0x40] sm:$0xff]
    %v32 = vld [vmem:[#allocation2 + $0x48] sm:$0xff]
    %v33 = vld [vmem:[#allocation2 + $0x50] sm:$0xff]
    %v34 = vld [vmem:[#allocation2 + $0x58] sm:$0xff]
    %v35 = vld [vmem:[#allocation2 + $0x60] sm:$0xff]
    %v36 = vld [vmem:[#allocation2 + $0x68] sm:$0xff]
    %v37 = vld [vmem:[#allocation2 + $0x70] sm:$0xff]
    %v38 = vld [vmem:[#allocation2 + $0x78] sm:$0xff]
    %vm39 = vcmp.ne.f32.partialorder %v23, %v23
    %vm40 = vcmp.ne.f32.partialorder %v24, %v24
    %vm41 = vcmp.ne.f32.partialorder %v25, %v25
    %vm42 = vcmp.ne.f32.partialorder %v26, %v26
    %vm43 = vcmp.ne.f32.partialorder %v27, %v27
    %vm44 = vcmp.ne.f32.partialorder %v28, %v28
    %vm45 = vcmp.ne.f32.partialorder %v29, %v29
    %vm46 = vcmp.ne.f32.partialorder %v30, %v30
    %vm47 = vcmp.ne.f32.partialorder %v31, %v31
    %vm48 = vcmp.ne.f32.partialorder %v32, %v32
    %vm49 = vcmp.ne.f32.partialorder %v33, %v33
    %vm50 = vcmp.ne.f32.partialorder %v34, %v34
    %vm51 = vcmp.ne.f32.partialorder %v35, %v35
    %vm52 = vcmp.ne.f32.partialorder %v36, %v36
    %vm53 = vcmp.ne.f32.partialorder %v37, %v37
    %vm54 = vcmp.ne.f32.partialorder %v38, %v38
    %v55 = vsel %vm39, 0.0, %v23
    %v56 = vsel %vm40, 0.0, %v24
    %v57 = vsel %vm41, 0.0, %v25
    %v58 = vsel %vm42, 0.0, %v26
    %v59 = vsel %vm43, 0.0, %v27
    %v60 = vsel %vm44, 0.0, %v28
    %v61 = vsel %vm45, 0.0, %v29
    %v62 = vsel %vm46, 0.0, %v30
    %v63 = vsel %vm47, 0.0, %v31
    %v64 = vsel %vm48, 0.0, %v32
    %v65 = vsel %vm49, 0.0, %v33
    %v66 = vsel %vm50, 0.0, %v34
    %v67 = vsel %vm51, 0.0, %v35
    %v68 = vsel %vm52, 0.0, %v36
    %v69 = vsel %vm53, 0.0, %v37
    %v70 = vsel %vm54, 0.0, %v38
    %vm71 = vcmask 130048
    %v72 = vsel %vm71, %v55, 0.0
    %v73 = vsel %vm71, %v56, 0.0
    %v74 = vadd.f32 %v72, %v73
    %v75 = vsel %vm71, %v57, 0.0
    %v76 = vadd.f32 %v74, %v75
    %v77 = vsel %vm71, %v58, 0.0
    %v78 = vadd.f32 %v76, %v77
    %v79 = vsel %vm71, %v59, 0.0
    %v80 = vadd.f32 %v78, %v79
    %v81 = vsel %vm71, %v60, 0.0
    %v82 = vadd.f32 %v80, %v81
    %v83 = vsel %vm71, %v61, 0.0
    %v84 = vadd.f32 %v82, %v83
    %v85 = vsel %vm71, %v62, 0.0
    %v86 = vadd.f32 %v84, %v85
    %v87 = vsel %vm71, %v63, 0.0
    %v88 = vadd.f32 %v86, %v87
    %v89 = vsel %vm71, %v64, 0.0
    %v90 = vadd.f32 %v88, %v89
    %v91 = vsel %vm71, %v65, 0.0
    %v92 = vadd.f32 %v90, %v91
    %v93 = vsel %vm71, %v66, 0.0
    %v94 = vadd.f32 %v92, %v93
    %v95 = vsel %vm71, %v67, 0.0
    %v96 = vadd.f32 %v94, %v95
    %v97 = vsel %vm71, %v68, 0.0
    %v98 = vadd.f32 %v96, %v97
    %v99 = vsel %vm71, %v69, 0.0
    %v100 = vadd.f32 %v98, %v99
    %v101 = vsel %vm71, %v70, 0.0
    %v102 = vadd.f32 %v100, %v101
    %103 = vadd.xlane.f32.xlu0 %v102
    %v104 = vpop.xlane.xlu0 %103
    %v105 = vrot.slane %v104, 4
    %v106 = vadd.f32 %v104, %v105
    %v107 = vrot.slane %v106, 2
    %v108 = vadd.f32 %v106, %v107
    %v109 = vrot.slane %v108, 1
    %v110 = vadd.f32 %v108, %v109
    %s111 = vtos %v110
    %s112 = smul.f32 %s111, 0.00048828125
    %v113 = vstv %s112
    %v114 = vsub.f32 %v55, %v113
    %v115 = vsub.f32 %v56, %v113
    %v116 = vsub.f32 %v57, %v113
    %v117 = vsub.f32 %v58, %v113
    %v118 = vsub.f32 %v59, %v113
    %v119 = vsub.f32 %v60, %v113
    %v120 = vsub.f32 %v61, %v113
    %v121 = vsub.f32 %v62, %v113
    %v122 = vsub.f32 %v63, %v113
    %v123 = vsub.f32 %v64, %v113
    %v124 = vsub.f32 %v65, %v113
    %v125 = vsub.f32 %v66, %v113
    %v126 = vsub.f32 %v67, %v113
    %v127 = vsub.f32 %v68, %v113
    %v128 = vsub.f32 %v69, %v113
    %v129 = vsub.f32 %v70, %v113
    %v130 = vmul.f32 %v114, %v114
    %v131 = vmul.f32 %v115, %v115
    %v132 = vmul.f32 %v116, %v116
    %v133 = vmul.f32 %v117, %v117
    %v134 = vmul.f32 %v118, %v118
    %v135 = vmul.f32 %v119, %v119
    %v136 = vmul.f32 %v120, %v120
    %v137 = vmul.f32 %v121, %v121
    %v138 = vmul.f32 %v122, %v122
    %v139 = vmul.f32 %v123, %v123
    %v140 = vmul.f32 %v124, %v124
    %v141 = vmul.f32 %v125, %v125
    %v142 = vmul.f32 %v126, %v126
    %v143 = vmul.f32 %v127, %v127
    %v144 = vmul.f32 %v128, %v128
    %v145 = vmul.f32 %v129, %v129
    %v146 = vsel %vm71, %v130, 0.0
    %v147 = vsel %vm71, %v131, 0.0
    %v148 = vadd.f32 %v146, %v147
    %v149 = vsel %vm71, %v132, 0.0
    %v150 = vadd.f32 %v148, %v149
    %v151 = vsel %vm71, %v133, 0.0
    %v152 = vadd.f32 %v150, %v151
    %v153 = vsel %vm71, %v134, 0.0
    %v154 = vadd.f32 %v152, %v153
    %v155 = vsel %vm71, %v135, 0.0
    %v156 = vadd.f32 %v154, %v155
    %v157 = vsel %vm71, %v136, 0.0
    %v158 = vadd.f32 %v156, %v157
    %v159 = vsel %vm71, %v137, 0.0
    %v160 = vadd.f32 %v158, %v159
    %v161 = vsel %vm71, %v138, 0.0
    %v162 = vadd.f32 %v160, %v161
    %v163 = vsel %vm71, %v139, 0.0
    %v164 = vadd.f32 %v162, %v163
    %v165 = vsel %vm71, %v140, 0.0
    %v166 = vadd.f32 %v164, %v165
    %v167 = vsel %vm71, %v141, 0.0
    %v168 = vadd.f32 %v166, %v167
    %v169 = vsel %vm71, %v142, 0.0
    %v170 = vadd.f32 %v168, %v169
    %v171 = vsel %vm71, %v143, 0.0
    %v172 = vadd.f32 %v170, %v171
    %v173 = vsel %vm71, %v144, 0.0
    %v174 = vadd.f32 %v172, %v173
    %v175 = vsel %vm71, %v145, 0.0
    %v176 = vadd.f32 %v174, %v175
    %177 = vadd.xlane.f32.xlu0 %v176
    %v178 = vpop.xlane.xlu0 %177
    %v179 = vrot.slane %v178, 4
    %v180 = vadd.f32 %v178, %v179
    %v181 = vrot.slane %v180, 2
    %v182 = vadd.f32 %v180, %v181
    %v183 = vrot.slane %v182, 1
    %v184 = vadd.f32 %v182, %v183
    %s185 = vtos %v184
    %s186 = smul.f32 %s185, 0.00048828125
    %v187 = vstv %s186
    %v188 = vrsqrt.pop %v187
    %s189 = vtos %v188
    %v190 = vstv %s189
    %v191 = vmul.f32 %v114, %v190
    %v192 = vmul.f32 %v115, %v190
    %v193 = vmul.f32 %v116, %v190
    %v194 = vmul.f32 %v117, %v190
    %v195 = vmul.f32 %v118, %v190
    %v196 = vmul.f32 %v119, %v190
    %v197 = vmul.f32 %v120, %v190
    %v198 = vmul.f32 %v121, %v190
    %v199 = vmul.f32 %v122, %v190
    %v200 = vmul.f32 %v123, %v190
    %v201 = vmul.f32 %v124, %v190
    %v202 = vmul.f32 %v125, %v190
    %v203 = vmul.f32 %v126, %v190
    %v204 = vmul.f32 %v127, %v190
    %v205 = vmul.f32 %v128, %v190
    %v206 = vmul.f32 %v129, %v190
    %207 = vst.msk [vmem:[#allocation5] sm:$0xff] %vm71, %v191
    %208 = vst.msk [vmem:[#allocation5 + $0x8] sm:$0xff] %vm71, %v192
    %209 = vst.msk [vmem:[#allocation5 + $0x10] sm:$0xff] %vm71, %v193
    %210 = vst.msk [vmem:[#allocation5 + $0x18] sm:$0xff] %vm71, %v194
    %211 = vst.msk [vmem:[#allocation5 + $0x20] sm:$0xff] %vm71, %v195
    %212 = vst.msk [vmem:[#allocation5 + $0x28] sm:$0xff] %vm71, %v196
    %213 = vst.msk [vmem:[#allocation5 + $0x30] sm:$0xff] %vm71, %v197
    %214 = vst.msk [vmem:[#allocation5 + $0x38] sm:$0xff] %vm71, %v198
    %215 = vst.msk [vmem:[#allocation5 + $0x40] sm:$0xff] %vm71, %v199
    %216 = vst.msk [vmem:[#allocation5 + $0x48] sm:$0xff] %vm71, %v200
    %217 = vst.msk [vmem:[#allocation5 + $0x50] sm:$0xff] %vm71, %v201
    %218 = vst.msk [vmem:[#allocation5 + $0x58] sm:$0xff] %vm71, %v202
    %219 = vst.msk [vmem:[#allocation5 + $0x60] sm:$0xff] %vm71, %v203
    %220 = vst.msk [vmem:[#allocation5 + $0x68] sm:$0xff] %vm71, %v204
    %221 = vst.msk [vmem:[#allocation5 + $0x70] sm:$0xff] %vm71, %v205
    %222 = vst.msk [vmem:[#allocation5 + $0x78] sm:$0xff] %vm71, %v206
    // Predicated region
    $region10: #{preprocessing.1} parent=1 // pred_check
      _
    $region11: #{preprocessing.1} parent=1 // pred_check_branch
      %224 = sbr.rel (0) target = $region13
    $region12: #{preprocessing.1} parent=1 // pred_region
      %s226 = ssub.s32 2048, 2048
      %227 = vsyncadd [#allocation4], %s226
      %s228 = sshll.u32 [#allocation5], 4
      %s229 = int_to_ptr.vmem [resolvable:$true] %s228
      %234 = dma.vmem_to_hbm [thread:$0]  %s229, 2048, %s1, [#allocation4], 128, 128, 8
    $region13: #{preprocessing.1} parent=1 // pred_fallthru
      _
    // Predicated region
    $region14: #{preprocessing.1} parent=1 // pred_check
      _
    $region15: #{preprocessing.1} parent=1 // pred_check_branch
      %236 = sbr.rel (0) target = $region17
    $region16: #{preprocessing.1} parent=1 // pred_region
      %237 = dma.done [#allocation4], 2048
    $region17: #{preprocessing.1} parent=1 // pred_fallthru
      _
    %238 = vsyncpa [#allocation3], 1
    %239 = vsyncpa [#allocation4], 1

</llo_original>
